<compile_context>
chip_gen: v7x
topology: tpu7x:2x2x1
jax: 0.10.0
libtpu: 0.0.40
codegen_flags: <defaults>
</compile_context>

<pallas_src>
import jax
import jax.numpy as jnp
from jax.experimental import pallas as pl
from jax.experimental.pallas import tpu as pltpu

KH, KW = 3, 3


def conv3x3_kernel(x_ref, w_ref, b_ref, o_ref, xband_ref):
    """One image per grid step.

    x_ref:     (1, Cin, H, W)        NCHW input block (VMEM)
    w_ref:     (KH*Cin*W, Wo*Cout)   banded weight (VMEM, grid-invariant block)
    b_ref:     (1, Wo*Cout)          bias tiled over Wo (VMEM, grid-invariant)
    o_ref:     (1, Ho, Wo*Cout)      lane-dense output slab (896 lanes)
    xband_ref: (Ho, KH*Cin*W)        VMEM scratch holding the input row-band
    """
    _, cin, _, w = x_ref.shape
    ho = o_ref.shape[1]

    # Assemble the row band: xband[r, (kh*Cin + ci)*W + x] = input[ci, r + kh, x].
    # 9 small static-offset stores; no reshapes / relayouts (unrolled at trace time).
    for kh in range(KH):
        for ci in range(cin):
            lane0 = (kh * cin + ci) * w
            xband_ref[:, lane0:lane0 + w] = x_ref[0, ci, kh:kh + ho, :]

    # Single fused MXU matmul over all taps (K = KH*Cin*W), f32 accumulation.
    acc = jnp.dot(xband_ref[...], w_ref[...], preferred_element_type=jnp.float32)
    o_ref[0] = (acc + b_ref[...]).astype(o_ref.dtype)


def _banded_weight(weight_oihw, width):
    """(Cout, Cin, KH, KW) -> (KH*Cin*W, Wo*Cout) banded (row-Toeplitz) matrix.

    wt[(kh*Cin+ci)*W + w, wo*Cout + co] = weight[co, ci, kh, w - wo]
                                          if 0 <= w - wo < KW else 0,
    so  out[ho, wo*Cout+co] = sum_k xband[ho, k] * wt[k, wo*Cout+co]
    equals the VALID, stride-1 3x3 convolution.
    """
    cout, cin, kh_, kw_ = weight_oihw.shape
    wo = width - kw_ + 1
    w_perm = jnp.transpose(weight_oihw, (2, 1, 3, 0))              # (KH, Cin, KW, Cout)
    kw_idx = jnp.arange(width)[:, None] - jnp.arange(wo)[None, :]  # (W, Wo)
    valid = (kw_idx >= 0) & (kw_idx < kw_)
    gathered = w_perm[:, :, jnp.clip(kw_idx, 0, kw_ - 1), :]       # (KH, Cin, W, Wo, Cout)
    banded = jnp.where(valid[None, None, :, :, None], gathered, 0.0)
    return banded.reshape(kh_ * cin * width, wo * cout)


def conv2d_pallas(x_nchw, weight_oihw, bias):
    """Matches nn.Conv2d(3, 64, 3) forward on an NCHW input (NCHW output)."""
    n, cin, h, w = x_nchw.shape
    cout = weight_oihw.shape[0]
    ho, wo = h - KH + 1, w - KW + 1

    wt = _banded_weight(weight_oihw, w).astype(x_nchw.dtype)       # (KH*Cin*W, Wo*Cout)
    b_slab = jnp.tile(bias, wo).reshape(1, wo * cout).astype(jnp.float32)

    cost = pl.CostEstimate(
        flops=2 * n * ho * wo * KH * KW * cin * cout,
        transcendentals=0,
        bytes_accessed=(x_nchw.size + wt.size + b_slab.size + n * ho * wo * cout) * 4,
    )

    out_slab = pl.pallas_call(
        conv3x3_kernel,
        out_shape=jax.ShapeDtypeStruct((n, ho, wo * cout), x_nchw.dtype),
        grid=(n,),
        in_specs=[
            pl.BlockSpec((1, cin, h, w), lambda i: (i, 0, 0, 0)),          # NCHW image
            pl.BlockSpec((KH * cin * w, wo * cout), lambda i: (0, 0)),     # banded weight
            pl.BlockSpec((1, wo * cout), lambda i: (0, 0)),                # bias slab
        ],
        out_specs=pl.BlockSpec((1, ho, wo * cout), lambda i: (i, 0, 0)),   # lane-dense
        scratch_shapes=[pltpu.VMEM((ho, KH * cin * w), x_nchw.dtype)],
        compiler_params=pltpu.CompilerParams(
            dimension_semantics=("parallel",)),
        cost_estimate=cost,
    )(x_nchw, wt, b_slab)

    # Lane-dense slab -> (N, Ho, Wo, Cout) -> NCHW (wrapper-side layout fix-up only).
    return jnp.transpose(out_slab.reshape(n, ho, wo, cout), (0, 3, 1, 2))


if __name__ == "__main__":
    key = jax.random.PRNGKey(0)
    k_x, k_w, k_b = jax.random.split(key, 3)

    # Small shapes consistent with the module: NCHW input with Cin=3.
    x = jax.random.normal(k_x, (2, 3, 16, 16), dtype=jnp.float32)
    weight = jax.random.normal(k_w, (64, 3, 3, 3), dtype=jnp.float32) * 0.1
    bias = jax.random.normal(k_b, (64,), dtype=jnp.float32) * 0.1

    out = jax.jit(conv2d_pallas)(x, weight, bias)
    out = jax.block_until_ready(out)

    # Reference check against XLA's conv (NCHW, OIHW).
    ref = jax.lax.conv_general_dilated(
        x, weight, window_strides=(1, 1), padding="VALID",
        dimension_numbers=("NCHW", "OIHW", "NCHW"),
    ) + bias.reshape(1, 64, 1, 1)

    assert out.shape == (2, 64, 14, 14), out.shape
    assert jnp.allclose(out, ref, atol=1e-3, rtol=1e-3), float(jnp.max(jnp.abs(out - ref)))

    print("KERNEL_OK")
</pallas_src>

<mosaic_0001>
module attributes {stable_mosaic.version = 11 : i64} {
  func.func @conv3x3_kernel(%arg0: i32, %arg1: memref<1x3x16x16xf32, #tpu.memory_space<vmem>>, %arg2: memref<144x896xf32, #tpu.memory_space<vmem>>, %arg3: memref<1x896xf32, #tpu.memory_space<vmem>>, %arg4: memref<1x14x896xf32, #tpu.memory_space<vmem>>, %arg5: memref<14x144xf32, #tpu.memory_space<vmem>>) attributes {dimension_semantics = [#tpu.dimension_semantics<parallel>], iteration_bounds = array<i64: 2>, scalar_prefetch = 0 : i64, scratch_operands = 1 : i64, tpu.core_type = #tpu.core_type<tc>, window_params = [{transform_indices = @transform_0, window_bounds = array<i64: 1, 3, 16, 16>}, {pipeline_mode = #tpu.pipeline_mode<synchronous>, transform_indices = @transform_1, window_bounds = array<i64: 144, 896>}, {pipeline_mode = #tpu.pipeline_mode<synchronous>, transform_indices = @transform_2, window_bounds = array<i64: 1, 896>}, {transform_indices = @transform_3, window_bounds = array<i64: 1, 14, 896>}]} {
    %c0 = arith.constant 0 : index
    %c0_0 = arith.constant 0 : index
    %c0_1 = arith.constant 0 : index
    %c0_2 = arith.constant 0 : index
    %0 = vector.load %arg1[%c0, %c0_0, %c0_1, %c0_2] : memref<1x3x16x16xf32, #tpu.memory_space<vmem>>, vector<1x1x14x16xf32>
    %1 = vector.shape_cast %0 : vector<1x1x14x16xf32> to vector<14x16xf32>
    %c0_3 = arith.constant 0 : index
    %c0_4 = arith.constant 0 : index
    %2 = vector.load %arg5[%c0_3, %c0_4] : memref<14x144xf32, #tpu.memory_space<vmem>>, vector<14x16xf32>
    tpu.vector_store %arg5[%c0_3, %c0_4], %1 {strides = array<i32>} : memref<14x144xf32, #tpu.memory_space<vmem>>, vector<14x16xf32>,
    %c0_5 = arith.constant 0 : index
    %c1 = arith.constant 1 : index
    %c0_6 = arith.constant 0 : index
    %c0_7 = arith.constant 0 : index
    %3 = vector.load %arg1[%c0_5, %c1, %c0_6, %c0_7] : memref<1x3x16x16xf32, #tpu.memory_space<vmem>>, vector<1x1x14x16xf32>
    %4 = vector.shape_cast %3 : vector<1x1x14x16xf32> to vector<14x16xf32>
    %c0_8 = arith.constant 0 : index
    %c16 = arith.constant 16 : index
    %5 = vector.load %arg5[%c0_8, %c16] : memref<14x144xf32, #tpu.memory_space<vmem>>, vector<14x16xf32>
    tpu.vector_store %arg5[%c0_8, %c16], %4 {strides = array<i32>} : memref<14x144xf32, #tpu.memory_space<vmem>>, vector<14x16xf32>,
    %c0_9 = arith.constant 0 : index
    %c2 = arith.constant 2 : index
    %c0_10 = arith.constant 0 : index
    %c0_11 = arith.constant 0 : index
    %6 = vector.load %arg1[%c0_9, %c2, %c0_10, %c0_11] : memref<1x3x16x16xf32, #tpu.memory_space<vmem>>, vector<1x1x14x16xf32>
    %7 = vector.shape_cast %6 : vector<1x1x14x16xf32> to vector<14x16xf32>
    %c0_12 = arith.constant 0 : index
    %c32 = arith.constant 32 : index
    %8 = vector.load %arg5[%c0_12, %c32] : memref<14x144xf32, #tpu.memory_space<vmem>>, vector<14x16xf32>
    tpu.vector_store %arg5[%c0_12, %c32], %7 {strides = array<i32>} : memref<14x144xf32, #tpu.memory_space<vmem>>, vector<14x16xf32>,
    %c0_13 = arith.constant 0 : index
    %c0_14 = arith.constant 0 : index
    %c1_15 = arith.constant 1 : index
    %c0_16 = arith.constant 0 : index
    %9 = vector.load %arg1[%c0_13, %c0_14, %c1_15, %c0_16] : memref<1x3x16x16xf32, #tpu.memory_space<vmem>>, vector<1x1x14x16xf32>
    %10 = vector.shape_cast %9 : vector<1x1x14x16xf32> to vector<14x16xf32>
    %c0_17 = arith.constant 0 : index
    %c48 = arith.constant 48 : index
    %11 = vector.load %arg5[%c0_17, %c48] : memref<14x144xf32, #tpu.memory_space<vmem>>, vector<14x16xf32>
    tpu.vector_store %arg5[%c0_17, %c48], %10 {strides = array<i32>} : memref<14x144xf32, #tpu.memory_space<vmem>>, vector<14x16xf32>,
    %c0_18 = arith.constant 0 : index
    %c1_19 = arith.constant 1 : index
    %c1_20 = arith.constant 1 : index
    %c0_21 = arith.constant 0 : index
    %12 = vector.load %arg1[%c0_18, %c1_19, %c1_20, %c0_21] : memref<1x3x16x16xf32, #tpu.memory_space<vmem>>, vector<1x1x14x16xf32>
    %13 = vector.shape_cast %12 : vector<1x1x14x16xf32> to vector<14x16xf32>
    %c0_22 = arith.constant 0 : index
    %c64 = arith.constant 64 : index
    %14 = vector.load %arg5[%c0_22, %c64] : memref<14x144xf32, #tpu.memory_space<vmem>>, vector<14x16xf32>
    tpu.vector_store %arg5[%c0_22, %c64], %13 {strides = array<i32>} : memref<14x144xf32, #tpu.memory_space<vmem>>, vector<14x16xf32>,
    %c0_23 = arith.constant 0 : index
    %c2_24 = arith.constant 2 : index
    %c1_25 = arith.constant 1 : index
    %c0_26 = arith.constant 0 : index
    %15 = vector.load %arg1[%c0_23, %c2_24, %c1_25, %c0_26] : memref<1x3x16x16xf32, #tpu.memory_space<vmem>>, vector<1x1x14x16xf32>
    %16 = vector.shape_cast %15 : vector<1x1x14x16xf32> to vector<14x16xf32>
    %c0_27 = arith.constant 0 : index
    %c80 = arith.constant 80 : index
    %17 = vector.load %arg5[%c0_27, %c80] : memref<14x144xf32, #tpu.memory_space<vmem>>, vector<14x16xf32>
    tpu.vector_store %arg5[%c0_27, %c80], %16 {strides = array<i32>} : memref<14x144xf32, #tpu.memory_space<vmem>>, vector<14x16xf32>,
    %c0_28 = arith.constant 0 : index
    %c0_29 = arith.constant 0 : index
    %c2_30 = arith.constant 2 : index
    %c0_31 = arith.constant 0 : index
    %18 = vector.load %arg1[%c0_28, %c0_29, %c2_30, %c0_31] : memref<1x3x16x16xf32, #tpu.memory_space<vmem>>, vector<1x1x14x16xf32>
    %19 = vector.shape_cast %18 : vector<1x1x14x16xf32> to vector<14x16xf32>
    %c0_32 = arith.constant 0 : index
    %c96 = arith.constant 96 : index
    %20 = vector.load %arg5[%c0_32, %c96] : memref<14x144xf32, #tpu.memory_space<vmem>>, vector<14x16xf32>
    tpu.vector_store %arg5[%c0_32, %c96], %19 {strides = array<i32>} : memref<14x144xf32, #tpu.memory_space<vmem>>, vector<14x16xf32>,
    %c0_33 = arith.constant 0 : index
    %c1_34 = arith.constant 1 : index
    %c2_35 = arith.constant 2 : index
    %c0_36 = arith.constant 0 : index
    %21 = vector.load %arg1[%c0_33, %c1_34, %c2_35, %c0_36] : memref<1x3x16x16xf32, #tpu.memory_space<vmem>>, vector<1x1x14x16xf32>
    %22 = vector.shape_cast %21 : vector<1x1x14x16xf32> to vector<14x16xf32>
    %c0_37 = arith.constant 0 : index
    %c112 = arith.constant 112 : index
    %23 = vector.load %arg5[%c0_37, %c112] : memref<14x144xf32, #tpu.memory_space<vmem>>, vector<14x16xf32>
    tpu.vector_store %arg5[%c0_37, %c112], %22 {strides = array<i32>} : memref<14x144xf32, #tpu.memory_space<vmem>>, vector<14x16xf32>,
    %c0_38 = arith.constant 0 : index
    %c2_39 = arith.constant 2 : index
    %c2_40 = arith.constant 2 : index
    %c0_41 = arith.constant 0 : index
    %24 = vector.load %arg1[%c0_38, %c2_39, %c2_40, %c0_41] : memref<1x3x16x16xf32, #tpu.memory_space<vmem>>, vector<1x1x14x16xf32>
    %25 = vector.shape_cast %24 : vector<1x1x14x16xf32> to vector<14x16xf32>
    %c0_42 = arith.constant 0 : index
    %c128 = arith.constant 128 : index
    %26 = vector.load %arg5[%c0_42, %c128] : memref<14x144xf32, #tpu.memory_space<vmem>>, vector<14x16xf32>
    tpu.vector_store %arg5[%c0_42, %c128], %25 {strides = array<i32>} : memref<14x144xf32, #tpu.memory_space<vmem>>, vector<14x16xf32>,
    %c0_43 = arith.constant 0 : index
    %c0_44 = arith.constant 0 : index
    %27 = vector.load %arg5[%c0_43, %c0_44] : memref<14x144xf32, #tpu.memory_space<vmem>>, vector<14x144xf32>
    %c0_45 = arith.constant 0 : index
    %c0_46 = arith.constant 0 : index
    %28 = vector.load %arg2[%c0_45, %c0_46] : memref<144x896xf32, #tpu.memory_space<vmem>>, vector<144x896xf32>
    %cst = arith.constant dense<0.000000e+00> : vector<14x896xf32>
    %29 = tpu.matmul %27, %28, %cst {dimension_numbers = #tpu.dot_dimension_numbers<[1], [0], [0], [1], [0, 0, 1, 1], [], []>} : vector<14x144xf32>, vector<144x896xf32>, vector<14x896xf32> -> vector<14x896xf32>
    %c0_47 = arith.constant 0 : index
    %c0_48 = arith.constant 0 : index
    %30 = vector.load %arg3[%c0_47, %c0_48] : memref<1x896xf32, #tpu.memory_space<vmem>>, vector<1x896xf32>
    %31 = vector.broadcast %30 : vector<1x896xf32> to vector<14x896xf32>
    %32 = arith.addf %29, %31 : vector<14x896xf32>
    %c0_49 = arith.constant 0 : index
    %c0_50 = arith.constant 0 : index
    %c0_51 = arith.constant 0 : index
    %33 = vector.load %arg4[%c0_49, %c0_50, %c0_51] : memref<1x14x896xf32, #tpu.memory_space<vmem>>, vector<1x14x896xf32>
    %34 = vector.shape_cast %33 : vector<1x14x896xf32> to vector<14x896xf32>
    %35 = vector.shape_cast %32 : vector<14x896xf32> to vector<1x14x896xf32>
    tpu.vector_store %arg4[%c0_49, %c0_50, %c0_51], %35 {strides = array<i32>} : memref<1x14x896xf32, #tpu.memory_space<vmem>>, vector<1x14x896xf32>,
    return
  }
  func.func @transform_0(%arg0: i32) -> (i32, i32, i32, i32) {
    %c0_i32 = arith.constant 0 : i32
    %c0_i32_0 = arith.constant 0 : i32
    %c0_i32_1 = arith.constant 0 : i32
    %c0_i32_2 = arith.constant 0 : i32
    return %arg0, %c0_i32, %c0_i32_0, %c0_i32_1 : i32, i32, i32, i32
  }
  func.func @transform_1(%arg0: i32) -> (i32, i32) {
    %c0_i32 = arith.constant 0 : i32
    %c0_i32_0 = arith.constant 0 : i32
    %c0_i32_1 = arith.constant 0 : i32
    return %c0_i32, %c0_i32_0 : i32, i32
  }
  func.func @transform_2(%arg0: i32) -> (i32, i32) {
    %c0_i32 = arith.constant 0 : i32
    %c0_i32_0 = arith.constant 0 : i32
    %c0_i32_1 = arith.constant 0 : i32
    return %c0_i32, %c0_i32_0 : i32, i32
  }
  func.func @transform_3(%arg0: i32) -> (i32, i32, i32) {
    %c0_i32 = arith.constant 0 : i32
    %c0_i32_0 = arith.constant 0 : i32
    %c0_i32_1 = arith.constant 0 : i32
    return %arg0, %c0_i32, %c0_i32_0 : i32, i32, i32
  }
}

</mosaic_0001>

<llo_original>
// kernel: tile.8
$region0: #{tile.8}
  #allocation0 [shape = 's32[1]{0}', space=sflag, size = 0x4, scoped, tag = 'scoped memory for tile.8']
  %s0 = inlined_call_operand.vmem [shape: f32[64], index: 0, kind: input, shape index: {}]
  %s1 = inlined_call_operand.vmem [shape: f32[14,64], index: 1, kind: output, shape index: {}]
  // Predicated region
  $region2: #{tile.8} parent=0 // pred_check
    _
  $region3: #{tile.8} parent=0 // pred_check_branch
    %3 = sbr.rel (0) target = $region5
  $region4: #{tile.8} parent=0 // pred_region
    _
  $region5: #{tile.8} parent=0 // pred_fallthru
    _
  %v4 = vld [vmem:[%s0] ss:$0 sm:$0xff]
  %5 = vst [vmem:[%s1] sm:$0xff] %v4
  %s6 = scalar_lea.vmem %s1, 8
  %7 = vst [vmem:[%s6] sm:$0xff] %v4

// kernel: tile.9
$region0: #{tile.9}
  %s0 = inlined_call_operand.vmem [shape: f32[14,64], index: 0, kind: input, shape index: {}]
  %s1 = inlined_call_operand.vmem [shape: f32[1,896], index: 1, kind: output, shape index: {}]
  $region1: #{tile.9} parent=0
    #allocation0 [shape = 'u8[28672]{0}', space=vmem, size = 0x7000, scoped, tag = 'scoped mem for output reshape']
    %v2 = vld [vmem:[%s0] ss:$2 sm:$0x7f]
    %vm3 = vcmask 523264
    %4 = vst.msk [vmem:[#allocation0] ss:$8 sm:$0xf] %vm3, %v2
    %5 = vst.msk [vmem:[#allocation0] ss:$8 sm:$0x70] %vm3, %v2
    %s6 = scalar_lea.vmem %s0, 1
    %v7 = vld [vmem:[%s6] ss:$2 sm:$0x7f]
    %8 = vrot.lane.b32.xlu0 %v7, 64
    %v9 = vpop.permute.xlu0 %8
    %vm10 = vcmask 1048064
    %11 = vst.msk [vmem:[#allocation0] ss:$8 sm:$0xf] %vm10, %v9
    %12 = vst.msk [vmem:[#allocation0] ss:$8 sm:$0x70] %vm10, %v9
    %s14 = sshllo.u32 0, 1
    %v16 = vld [vmem:[#allocation0] sm:%s14]
    %s17 = sshllo.u32 0, 1
    %18 = vst [vmem:[%s1] sm:%s17] %v16
    %s19 = scalar_lea.vmem [#allocation0], 8
    %v20 = vld [vmem:[%s19] sm:%s14]
    %s21 = sshllo.u32 0, 1
    %s22 = scalar_lea.vmem %s1, 1
    %23 = vst [vmem:[%s22] sm:%s21] %v20
    %s24 = scalar_lea.vmem [#allocation0], 16
    %v25 = vld [vmem:[%s24] sm:%s14]
    %s26 = sshllo.u32 0, 1
    %s27 = smul.addr 1, 2
    %s28 = scalar_lea.vmem %s1, %s27
    %29 = vst [vmem:[%s28] sm:%s26] %v25
    %s30 = scalar_lea.vmem [#allocation0], 24
    %v31 = vld [vmem:[%s30] sm:%s14]
    %s32 = sshllo.u32 0, 1
    %s33 = smul.addr 1, 3
    %s34 = scalar_lea.vmem %s1, %s33
    %35 = vst [vmem:[%s34] sm:%s32] %v31
    %s36 = scalar_lea.vmem [#allocation0], 32
    %v37 = vld [vmem:[%s36] sm:%s14]
    %s38 = sshllo.u32 0, 1
    %s39 = smul.addr 1, 4
    %s40 = scalar_lea.vmem %s1, %s39
    %41 = vst [vmem:[%s40] sm:%s38] %v37
    %s42 = scalar_lea.vmem [#allocation0], 40
    %v43 = vld [vmem:[%s42] sm:%s14]
    %s44 = sshllo.u32 0, 1
    %s45 = smul.addr 1, 5
    %s46 = scalar_lea.vmem %s1, %s45
    %47 = vst [vmem:[%s46] sm:%s44] %v43
    %s48 = scalar_lea.vmem [#allocation0], 48
    %v49 = vld [vmem:[%s48] sm:%s14]
    %s50 = sshllo.u32 0, 1
    %s51 = smul.addr 1, 6
    %s52 = scalar_lea.vmem %s1, %s51
    %53 = vst [vmem:[%s52] sm:%s50] %v49

// kernel: conv2d_pallas.1
$region0: #{conv2d_pallas.1}
  #allocation0 [shape = 'u32[]', space=smem, size = 0x4, offset = 0x4, fixed_abs, tag = 'smem constant byte address 0x4 - core index']
  #allocation1 [shape = 'u32[144,128]{1,0:T(1,128)}', space=vmem, size = 0x12000, scoped, tag = 'internal scratch']
  #allocation2 [shape = 'f32[14,144]{1,0:T(8,128)}', space=vmem, size = 0x4000, scoped, tag = 'scratch operand']
  %s0 = inlined_call_operand.vmem [shape: f32[2,3,16,16], index: 0, kind: input, shape index: {}]
  %s1 = inlined_call_operand.vmem [shape: f32[144,896], index: 1, kind: input, shape index: {}]
  %s2 = inlined_call_operand.vmem [shape: f32[1,896], index: 2, kind: input, shape index: {}]
  %s3 = inlined_call_operand.vmem [shape: f32[2,14,896], index: 3, kind: output, shape index: {}]
  %s4 = sld [smem:[#allocation0]]
  $region45: #{conv2d_pallas.1} parent=0
    _
  %s6 = ssub.s32 1, %s4
  %s7 = scalar_select 0, %s6, %s4
  loop: start=0, step=1, limit=4
  $region2: #{conv2d_pallas.1} parent=0 // loop_pre_header
    _
  $region3: #{conv2d_pallas.1} parent=0 // loop_header
    %s9 = sphi 0, %s13
    %p10 = scmp.ge.s32.totalorder %s9, 4
    %s19 = sphi 0, %s21
    %s22 = sphi 0, %s19
    %s23 = sphi 0, %s22
    %s39 = sphi 0, %s23
    %s43 = sphi 0, %s43
    %s45 = sphi 0, %s43
    %s46 = sphi 0, %s45
    %s60 = sphi 0, %s46
    %s64 = sphi 0, %s64
    %s66 = sphi 0, %s64
    %s67 = sphi 0, %s66
    %s81 = sphi 0, %s67
    %s87 = sphi 0, %s89
    %s90 = sphi 0, %s87
    %s91 = sphi 0, %s90
    %s107 = sphi 0, %s91
  $region4: #{conv2d_pallas.1} parent=0 // loop_header_branch
    %12 = sbr.rel (%p10) target = $region8
  $region5: #{conv2d_pallas.1} parent=0 // loop_body
    %s14 = ssub.s32 %s9, 1
    %s15 = ssub.s32 %s9, 2
    %s16 = sadd.s32 %s9, 1
    %s17 = ssub.s32 %s9, %s16
    %p18 = scmp.eq.s32.totalorder %s17, 0
    %s20 = sadd.s32 %s19, 1
    %s21 = scalar_select %p18, %s19, %s20
    %p24 = pneg %p18
    %p25 = scmp.eq.s32.totalorder %s9, 1
    %p26 = por %p24, %p25
    %p27 = scmp.ne.s32.totalorder %s19, %s22
    %p28 = scmp.eq.s32.totalorder %s9, 0
    %p29 = por %p27, %p28
    %p30 = scmp.ne.s32.totalorder %s19, %s22
    %p31 = scmp.eq.s32.totalorder %s14, 1
    %p32 = por %p30, %p31
    %p33 = scmp.ne.s32.totalorder %s22, %s23
    %p34 = scmp.eq.s32.totalorder %s14, 0
    %p35 = por %p33, %p34
    %p36 = scmp.ne.s32.totalorder %s22, %s23
    %p37 = scmp.eq.s32.totalorder %s15, 1
    %p38 = por %p36, %p37
    %p40 = scmp.ne.s32.totalorder %s23, %s39
    %p41 = scmp.eq.s32.totalorder %s15, 0
    %p42 = por %p40, %p41
    %s44 = sadd.s32 %s43, 1
    %p47 = scmp.eq.s32.totalorder %s9, 1
    %p48 = scmp.ne.s32.totalorder %s43, %s45
    %p49 = scmp.eq.s32.totalorder %s9, 0
    %p50 = por %p48, %p49
    %p51 = scmp.ne.s32.totalorder %s43, %s45
    %p52 = scmp.eq.s32.totalorder %s14, 1
    %p53 = por %p51, %p52
    %p54 = scmp.ne.s32.totalorder %s45, %s46
    %p55 = scmp.eq.s32.totalorder %s14, 0
    %p56 = por %p54, %p55
    %p57 = scmp.ne.s32.totalorder %s45, %s46
    %p58 = scmp.eq.s32.totalorder %s15, 1
    %p59 = por %p57, %p58
    %p61 = scmp.ne.s32.totalorder %s46, %s60
    %p62 = scmp.eq.s32.totalorder %s15, 0
    %p63 = por %p61, %p62
    %s65 = sadd.s32 %s64, 1
    %p68 = scmp.eq.s32.totalorder %s9, 1
    %p69 = scmp.ne.s32.totalorder %s64, %s66
    %p70 = scmp.eq.s32.totalorder %s9, 0
    %p71 = por %p69, %p70
    %p72 = scmp.ne.s32.totalorder %s64, %s66
    %p73 = scmp.eq.s32.totalorder %s14, 1
    %p74 = por %p72, %p73
    %p75 = scmp.ne.s32.totalorder %s66, %s67
    %p76 = scmp.eq.s32.totalorder %s14, 0
    %p77 = por %p75, %p76
    %p78 = scmp.ne.s32.totalorder %s66, %s67
    %p79 = scmp.eq.s32.totalorder %s15, 1
    %p80 = por %p78, %p79
    %p82 = scmp.ne.s32.totalorder %s67, %s81
    %p83 = scmp.eq.s32.totalorder %s15, 0
    %p84 = por %p82, %p83
    %s85 = ssub.s32 %s9, %s16
    %p86 = scmp.eq.s32.totalorder %s85, 0
    %s88 = sadd.s32 %s87, 1
    %s89 = scalar_select %p86, %s87, %s88
    %p92 = pneg %p86
    %p93 = scmp.eq.s32.totalorder %s9, 1
    %p94 = por %p92, %p93
    %p95 = scmp.ne.s32.totalorder %s87, %s90
    %p96 = scmp.eq.s32.totalorder %s9, 0
    %p97 = por %p95, %p96
    %p98 = scmp.ne.s32.totalorder %s87, %s90
    %p99 = scmp.eq.s32.totalorder %s14, 1
    %p100 = por %p98, %p99
    %p101 = scmp.ne.s32.totalorder %s90, %s91
    %p102 = scmp.eq.s32.totalorder %s14, 0
    %p103 = por %p101, %p102
    %p104 = scmp.ne.s32.totalorder %s90, %s91
    %p105 = scmp.eq.s32.totalorder %s15, 1
    %p106 = por %p104, %p105
    %p108 = scmp.ne.s32.totalorder %s91, %s107
    %p109 = scmp.eq.s32.totalorder %s15, 0
    %p110 = por %p108, %p109
    %p111 = scmp.le.s32.totalorder 1, %s9
    %p112 = scmp.lt.s32.totalorder %s9, 3
    %p113 = pnand %p111, %p112
    %p114 = pneg %p113
    // Predicated region
    $region9: #{conv2d_pallas.1} parent=5 // pred_check
      _
    $region10: #{conv2d_pallas.1} parent=5 // pred_check_branch
      %116 = sbr.rel (%p113) target = $region12
    $region11: #{conv2d_pallas.1} parent=5 // pred_region
      %s117 = ssub.s32 %s9, 1
      // Predicated region
      $region13: #{conv2d_pallas.1} parent=11 // pred_check
        %p118 = pneg %p56
      $region14: #{conv2d_pallas.1} parent=11 // pred_check_branch
        %120 = sbr.rel (%p118) target = $region16
      $region15: #{conv2d_pallas.1} parent=11 // pred_region
        _
      $region16: #{conv2d_pallas.1} parent=11 // pred_fallthru
        _
      // Predicated region
      $region17: #{conv2d_pallas.1} parent=11 // pred_check
        %p121 = pneg %p77
      $region18: #{conv2d_pallas.1} parent=11 // pred_check_branch
        %123 = sbr.rel (%p121) target = $region20
      $region19: #{conv2d_pallas.1} parent=11 // pred_region
        _
      $region20: #{conv2d_pallas.1} parent=11 // pred_fallthru
        _
    $region12: #{conv2d_pallas.1} parent=5 // pred_fallthru
      _
    %p124 = scmp.lt.s32.totalorder %s9, 2
    // Predicated region
    $region21: #{conv2d_pallas.1} parent=5 // pred_check
      %p125 = pneg %p124
    $region22: #{conv2d_pallas.1} parent=5 // pred_check_branch
      %127 = sbr.rel (%p125) target = $region24
    $region23: #{conv2d_pallas.1} parent=5 // pred_region
      // Predicated region
      $region25: #{conv2d_pallas.1} parent=23 // pred_check
        %p128 = pneg %p29
      $region26: #{conv2d_pallas.1} parent=23 // pred_check_branch
        %130 = sbr.rel (%p128) target = $region28
      $region27: #{conv2d_pallas.1} parent=23 // pred_region
        %p131 = scmp.lt.s32.totalorder %s9, 1
        %s132 = scalar_select %p131, %s9, 1
        %s133 = smul.addr %s132, 6
        %s134 = smul.addr %s133, 8
        %s135 = scalar_lea.vmem %s0, %s134
      $region28: #{conv2d_pallas.1} parent=23 // pred_fallthru
        _
    $region24: #{conv2d_pallas.1} parent=5 // pred_fallthru
      _
    %p136 = scmp.le.s32.totalorder 1, %s9
    %p137 = scmp.lt.s32.totalorder %s9, 3
    %p138 = pnand %p136, %p137
    %p139 = pneg %p138
    // Predicated region
    $region29: #{conv2d_pallas.1} parent=5 // pred_check
      _
    $region30: #{conv2d_pallas.1} parent=5 // pred_check_branch
      %141 = sbr.rel (%p138) target = $region32
    $region31: #{conv2d_pallas.1} parent=5 // pred_region
      %s142 = ssub.s32 %s9, 1
      %p143 = scmp.lt.s32.totalorder %s14, 1
      %s144 = scalar_select %p143, %s14, 1
      %s145 = smul.addr %s144, 6
      %s146 = smul.addr %s145, 8
      %s147 = scalar_lea.vmem %s0, %s146
      %p148 = pneg %p35
      %p149 = pneg %p32
      %p150 = pneg %p56
      %p151 = pneg %p53
      %p152 = pneg %p77
      %p153 = pneg %p74
      %p154 = pneg %p103
      %p155 = pneg %p100
      %p156 = scmp.lt.s32.totalorder %s14, 1
      %s157 = scalar_select %p156, %s14, 1
      %s158 = smul.addr %s157, 14
      %s159 = smul.addr %s158, 8
      %s160 = scalar_lea.vmem %s3, %s159
      %p161 = scmp.lt.s32.totalorder %s14, 1
      %s162 = scalar_select %p161, %s14, 1
      %s163 = smul.addr %s162, 6
      %s164 = smul.addr %s163, 8
      %s165 = scalar_lea.vmem %s0, %s164
      %p166 = scmp.lt.s32.totalorder %s14, 1
      %s167 = scalar_select %p166, %s14, 1
      %s168 = smul.addr %s167, 14
      %s169 = smul.addr %s168, 8
      %s170 = scalar_lea.vmem %s3, %s169
      %v171 = vld [vmem:[%s165] sm:$0xff]
      %v172 = vld [vmem:[%s165 + $0x8] sm:$0x3f]
      %vm173 = vcmask 130048
      %174 = vst.msk [vmem:[#allocation2] sm:$0xff] %vm173, %v171
      %vm175 = vcmask 128000
      %176 = vst.msk [vmem:[#allocation2 + $0x10] sm:$0x3f] %vm175, %v172
      %s177 = scalar_lea.vmem %s165, 16
      %v178 = vld [vmem:[%s177] sm:$0xff]
      %v179 = vld [vmem:[%s177 + $0x8] sm:$0x3f]
      %182 = vrot.lane.b32.xlu0 %v178, 16
      %v183 = vpop.permute.xlu0 %182
      %184 = vrot.lane.b32.xlu0 %v179, 16
      %v185 = vpop.permute.xlu0 %184
      %vm188 = vcmask 261248
      %189 = vst.msk [vmem:[#allocation2] sm:$0xff] %vm188, %v183
      %vm190 = vcmask 259200
      %191 = vst.msk [vmem:[#allocation2 + $0x10] sm:$0x3f] %vm190, %v185
      %s192 = scalar_lea.vmem %s165, 32
      %v193 = vld [vmem:[%s192] sm:$0xff]
      %v194 = vld [vmem:[%s192 + $0x8] sm:$0x3f]
      %197 = vrot.lane.b32.xlu0 %v193, 32
      %v198 = vpop.permute.xlu0 %197
      %199 = vrot.lane.b32.xlu0 %v194, 32
      %v200 = vpop.permute.xlu0 %199
      %vm203 = vcmask 392448
      %204 = vst.msk [vmem:[#allocation2] sm:$0xff] %vm203, %v198
      %vm205 = vcmask 390400
      %206 = vst.msk [vmem:[#allocation2 + $0x10] sm:$0x3f] %vm205, %v200
      %v207 = vld [vmem:[%s165 + $0x1] sm:$0xff]
      %v208 = vld [vmem:[%s165 + $0x9] sm:$0x3f]
      %211 = vrot.lane.b32.xlu0 %v207, 48
      %v212 = vpop.permute.xlu0 %211
      %213 = vrot.lane.b32.xlu0 %v208, 48
      %v214 = vpop.permute.xlu0 %213
      %vm217 = vcmask 523648
      %218 = vst.msk [vmem:[#allocation2] sm:$0xff] %vm217, %v212
      %vm219 = vcmask 521600
      %220 = vst.msk [vmem:[#allocation2 + $0x10] sm:$0x3f] %vm219, %v214
      %v221 = vld [vmem:[%s177 + $0x1] sm:$0xff]
      %v222 = vld [vmem:[%s177 + $0x9] sm:$0x3f]
      %225 = vrot.lane.b32.xlu0 %v221, 64
      %v226 = vpop.permute.xlu0 %225
      %227 = vrot.lane.b32.xlu0 %v222, 64
      %v228 = vpop.permute.xlu0 %227
      %vm231 = vcmask 654848
      %232 = vst.msk [vmem:[#allocation2] sm:$0xff] %vm231, %v226
      %vm233 = vcmask 652800
      %234 = vst.msk [vmem:[#allocation2 + $0x10] sm:$0x3f] %vm233, %v228
      %v235 = vld [vmem:[%s192 + $0x1] sm:$0xff]
      %v236 = vld [vmem:[%s192 + $0x9] sm:$0x3f]
      %239 = vrot.lane.b32.xlu0 %v235, 80
      %v240 = vpop.permute.xlu0 %239
      %241 = vrot.lane.b32.xlu0 %v236, 80
      %v242 = vpop.permute.xlu0 %241
      %vm245 = vcmask 786048
      %246 = vst.msk [vmem:[#allocation2] sm:$0xff] %vm245, %v240
      %vm247 = vcmask 784000
      %248 = vst.msk [vmem:[#allocation2 + $0x10] sm:$0x3f] %vm247, %v242
      %v249 = vld [vmem:[%s165 + $0x2] sm:$0xff]
      %v250 = vld [vmem:[%s165 + $0xa] sm:$0x3f]
      %253 = vrot.lane.b32.xlu0 %v249, 96
      %v254 = vpop.permute.xlu0 %253
      %255 = vrot.lane.b32.xlu0 %v250, 96
      %v256 = vpop.permute.xlu0 %255
      %vm259 = vcmask 917248
      %260 = vst.msk [vmem:[#allocation2] sm:$0xff] %vm259, %v254
      %vm261 = vcmask 915200
      %262 = vst.msk [vmem:[#allocation2 + $0x10] sm:$0x3f] %vm261, %v256
      %v263 = vld [vmem:[%s177 + $0x2] sm:$0xff]
      %v264 = vld [vmem:[%s177 + $0xa] sm:$0x3f]
      %267 = vrot.lane.b32.xlu0 %v263, 112
      %v268 = vpop.permute.xlu0 %267
      %269 = vrot.lane.b32.xlu0 %v264, 112
      %v270 = vpop.permute.xlu0 %269
      %vm273 = vcmask 1048448
      %274 = vst.msk [vmem:[#allocation2] sm:$0xff] %vm273, %v268
      %vm275 = vcmask 1046400
      %276 = vst.msk [vmem:[#allocation2 + $0x10] sm:$0x3f] %vm275, %v270
      %v277 = vld [vmem:[%s192 + $0x2] sm:$0xff]
      %v278 = vld [vmem:[%s192 + $0xa] sm:$0x3f]
      %279 = vst.msk [vmem:[#allocation2 + $0x8] sm:$0xff] %vm173, %v277
      %280 = vst.msk [vmem:[#allocation2 + $0x18] sm:$0x3f] %vm175, %v278
      %v281 = vld [vmem:[#allocation2] sm:$0xff]
      %v282 = vld [vmem:[#allocation2 + $0x8] sm:$0xff]
      %v283 = vld [vmem:[#allocation2 + $0x10] sm:$0x3f]
      %v284 = vld [vmem:[#allocation2 + $0x18] sm:$0x3f]
      %v285 = vld [vmem:[%s1] sm:$0xff]
      %v286 = vld [vmem:[%s1 + $0x8] sm:$0xff]
      %v287 = vld [vmem:[%s1 + $0x10] sm:$0xff]
      %v288 = vld [vmem:[%s1 + $0x18] sm:$0xff]
      %v289 = vld [vmem:[%s1 + $0x20] sm:$0xff]
      %v290 = vld [vmem:[%s1 + $0x28] sm:$0xff]
      %v291 = vld [vmem:[%s1 + $0x30] sm:$0xff]
      %v292 = vld [vmem:[%s1 + $0x38] sm:$0xff]
      %v293 = vld [vmem:[%s1 + $0x40] sm:$0xff]
      %v294 = vld [vmem:[%s1 + $0x48] sm:$0xff]
      %v295 = vld [vmem:[%s1 + $0x50] sm:$0xff]
      %v296 = vld [vmem:[%s1 + $0x58] sm:$0xff]
      %v297 = vld [vmem:[%s1 + $0x60] sm:$0xff]
      %v298 = vld [vmem:[%s1 + $0x68] sm:$0xff]
      %v299 = vld [vmem:[%s1 + $0x70] sm:$0xff]
      %v300 = vld [vmem:[%s1 + $0x78] sm:$0xff]
      %v301 = vld [vmem:[%s1 + $0x80] sm:$0xff]
      %v302 = vld [vmem:[%s1 + $0x88] sm:$0xff]
      %v303 = vld [vmem:[%s1 + $0x90] sm:$0xff]
      %v304 = vld [vmem:[%s1 + $0x98] sm:$0xff]
      %v305 = vld [vmem:[%s1 + $0xa0] sm:$0xff]
      %v306 = vld [vmem:[%s1 + $0xa8] sm:$0xff]
      %v307 = vld [vmem:[%s1 + $0xb0] sm:$0xff]
      %v308 = vld [vmem:[%s1 + $0xb8] sm:$0xff]
      %v309 = vld [vmem:[%s1 + $0xc0] sm:$0xff]
      %v310 = vld [vmem:[%s1 + $0xc8] sm:$0xff]
      %v311 = vld [vmem:[%s1 + $0xd0] sm:$0xff]
      %v312 = vld [vmem:[%s1 + $0xd8] sm:$0xff]
      %v313 = vld [vmem:[%s1 + $0xe0] sm:$0xff]
      %v314 = vld [vmem:[%s1 + $0xe8] sm:$0xff]
      %v315 = vld [vmem:[%s1 + $0xf0] sm:$0xff]
      %v316 = vld [vmem:[%s1 + $0xf8] sm:$0xff]
      %v317 = vld [vmem:[%s1 + $0x100] sm:$0xff]
      %v318 = vld [vmem:[%s1 + $0x108] sm:$0xff]
      %v319 = vld [vmem:[%s1 + $0x110] sm:$0xff]
      %v320 = vld [vmem:[%s1 + $0x118] sm:$0xff]
      %v321 = vld [vmem:[%s1 + $0x120] sm:$0xff]
      %v322 = vld [vmem:[%s1 + $0x128] sm:$0xff]
      %v323 = vld [vmem:[%s1 + $0x130] sm:$0xff]
      %v324 = vld [vmem:[%s1 + $0x138] sm:$0xff]
      %v325 = vld [vmem:[%s1 + $0x140] sm:$0xff]
      %v326 = vld [vmem:[%s1 + $0x148] sm:$0xff]
      %v327 = vld [vmem:[%s1 + $0x150] sm:$0xff]
      %v328 = vld [vmem:[%s1 + $0x158] sm:$0xff]
      %v329 = vld [vmem:[%s1 + $0x160] sm:$0xff]
      %v330 = vld [vmem:[%s1 + $0x168] sm:$0xff]
      %v331 = vld [vmem:[%s1 + $0x170] sm:$0xff]
      %v332 = vld [vmem:[%s1 + $0x178] sm:$0xff]
      %v333 = vld [vmem:[%s1 + $0x180] sm:$0xff]
      %v334 = vld [vmem:[%s1 + $0x188] sm:$0xff]
      %v335 = vld [vmem:[%s1 + $0x190] sm:$0xff]
      %v336 = vld [vmem:[%s1 + $0x198] sm:$0xff]
      %v337 = vld [vmem:[%s1 + $0x1a0] sm:$0xff]
      %v338 = vld [vmem:[%s1 + $0x1a8] sm:$0xff]
      %v339 = vld [vmem:[%s1 + $0x1b0] sm:$0xff]
      %v340 = vld [vmem:[%s1 + $0x1b8] sm:$0xff]
      %v341 = vld [vmem:[%s1 + $0x1c0] sm:$0xff]
      %v342 = vld [vmem:[%s1 + $0x1c8] sm:$0xff]
      %v343 = vld [vmem:[%s1 + $0x1d0] sm:$0xff]
      %v344 = vld [vmem:[%s1 + $0x1d8] sm:$0xff]
      %v345 = vld [vmem:[%s1 + $0x1e0] sm:$0xff]
      %v346 = vld [vmem:[%s1 + $0x1e8] sm:$0xff]
      %v347 = vld [vmem:[%s1 + $0x1f0] sm:$0xff]
      %v348 = vld [vmem:[%s1 + $0x1f8] sm:$0xff]
      %v349 = vld [vmem:[%s1 + $0x200] sm:$0xff]
      %v350 = vld [vmem:[%s1 + $0x208] sm:$0xff]
      %v351 = vld [vmem:[%s1 + $0x210] sm:$0xff]
      %v352 = vld [vmem:[%s1 + $0x218] sm:$0xff]
      %v353 = vld [vmem:[%s1 + $0x220] sm:$0xff]
      %v354 = vld [vmem:[%s1 + $0x228] sm:$0xff]
      %v355 = vld [vmem:[%s1 + $0x230] sm:$0xff]
      %v356 = vld [vmem:[%s1 + $0x238] sm:$0xff]
      %v357 = vld [vmem:[%s1 + $0x240] sm:$0xff]
      %v358 = vld [vmem:[%s1 + $0x248] sm:$0xff]
      %v359 = vld [vmem:[%s1 + $0x250] sm:$0xff]
      %v360 = vld [vmem:[%s1 + $0x258] sm:$0xff]
      %v361 = vld [vmem:[%s1 + $0x260] sm:$0xff]
      %v362 = vld [vmem:[%s1 + $0x268] sm:$0xff]
      %v363 = vld [vmem:[%s1 + $0x270] sm:$0xff]
      %v364 = vld [vmem:[%s1 + $0x278] sm:$0xff]
      %v365 = vld [vmem:[%s1 + $0x280] sm:$0xff]
      %v366 = vld [vmem:[%s1 + $0x288] sm:$0xff]
      %v367 = vld [vmem:[%s1 + $0x290] sm:$0xff]
      %v368 = vld [vmem:[%s1 + $0x298] sm:$0xff]
      %v369 = vld [vmem:[%s1 + $0x2a0] sm:$0xff]
      %v370 = vld [vmem:[%s1 + $0x2a8] sm:$0xff]
      %v371 = vld [vmem:[%s1 + $0x2b0] sm:$0xff]
      %v372 = vld [vmem:[%s1 + $0x2b8] sm:$0xff]
      %v373 = vld [vmem:[%s1 + $0x2c0] sm:$0xff]
      %v374 = vld [vmem:[%s1 + $0x2c8] sm:$0xff]
      %v375 = vld [vmem:[%s1 + $0x2d0] sm:$0xff]
      %v376 = vld [vmem:[%s1 + $0x2d8] sm:$0xff]
      %v377 = vld [vmem:[%s1 + $0x2e0] sm:$0xff]
      %v378 = vld [vmem:[%s1 + $0x2e8] sm:$0xff]
      %v379 = vld [vmem:[%s1 + $0x2f0] sm:$0xff]
      %v380 = vld [vmem:[%s1 + $0x2f8] sm:$0xff]
      %v381 = vld [vmem:[%s1 + $0x300] sm:$0xff]
      %v382 = vld [vmem:[%s1 + $0x308] sm:$0xff]
      %v383 = vld [vmem:[%s1 + $0x310] sm:$0xff]
      %v384 = vld [vmem:[%s1 + $0x318] sm:$0xff]
      %v385 = vld [vmem:[%s1 + $0x320] sm:$0xff]
      %v386 = vld [vmem:[%s1 + $0x328] sm:$0xff]
      %v387 = vld [vmem:[%s1 + $0x330] sm:$0xff]
      %v388 = vld [vmem:[%s1 + $0x338] sm:$0xff]
      %v389 = vld [vmem:[%s1 + $0x340] sm:$0xff]
      %v390 = vld [vmem:[%s1 + $0x348] sm:$0xff]
      %v391 = vld [vmem:[%s1 + $0x350] sm:$0xff]
      %v392 = vld [vmem:[%s1 + $0x358] sm:$0xff]
      %v393 = vld [vmem:[%s1 + $0x360] sm:$0xff]
      %v394 = vld [vmem:[%s1 + $0x368] sm:$0xff]
      %v395 = vld [vmem:[%s1 + $0x370] sm:$0xff]
      %v396 = vld [vmem:[%s1 + $0x378] sm:$0xff]
      %v397 = vld [vmem:[%s1 + $0x380] sm:$0xff]
      %v398 = vld [vmem:[%s1 + $0x388] sm:$0xff]
      %v399 = vld [vmem:[%s1 + $0x390] sm:$0xff]
      %v400 = vld [vmem:[%s1 + $0x398] sm:$0xff]
      %v401 = vld [vmem:[%s1 + $0x3a0] sm:$0xff]
      %v402 = vld [vmem:[%s1 + $0x3a8] sm:$0xff]
      %v403 = vld [vmem:[%s1 + $0x3b0] sm:$0xff]
      %v404 = vld [vmem:[%s1 + $0x3b8] sm:$0xff]
      %v405 = vld [vmem:[%s1 + $0x3c0] sm:$0xff]
      %v406 = vld [vmem:[%s1 + $0x3c8] sm:$0xff]
      %v407 = vld [vmem:[%s1 + $0x3d0] sm:$0xff]
      %v408 = vld [vmem:[%s1 + $0x3d8] sm:$0xff]
      %v409 = vld [vmem:[%s1 + $0x3e0] sm:$0xff]
      %v410 = vld [vmem:[%s1 + $0x3e8] sm:$0xff]
      %v411 = vld [vmem:[%s2] sm:$0xff]
      %v413 = vlaneseq
      %v414 = vshrl.u32 %v413, 7
      %v415 = vsub.s32 0, %v414
      %v416 = vrot.slane %v411, %v415
      %v417 = vlaneseq
      %v418 = vshrl.u32 %v417, 7
      %v419 = vsub.s32 1, %v418
      %v420 = vrot.slane %v411, %v419
      %v421 = vlaneseq
      %v422 = vshrl.u32 %v421, 7
      %v423 = vsub.s32 2, %v422
      %v424 = vrot.slane %v411, %v423
      %v425 = vlaneseq
      %v426 = vshrl.u32 %v425, 7
      %v427 = vsub.s32 3, %v426
      %v428 = vrot.slane %v411, %v427
      %v429 = vlaneseq
      %v430 = vshrl.u32 %v429, 7
      %v431 = vsub.s32 4, %v430
      %v432 = vrot.slane %v411, %v431
      %v433 = vlaneseq
      %v434 = vshrl.u32 %v433, 7
      %v435 = vsub.s32 5, %v434
      %v436 = vrot.slane %v411, %v435
      %v437 = vlaneseq
      %v438 = vshrl.u32 %v437, 7
      %v439 = vsub.s32 6, %v438
      %v440 = vrot.slane %v411, %v439
      %v449 = vsel %vm173, %v282, 0
      %v452 = vsel %vm173, %v284, 0
      %454 = vmatprep.subr.mxu0 %v286
      %455 = vmatpush1.msra.mxu0 %v285
      %456 = vmatprep.subr.mxu0 %v293
      %457 = vmatpush1.msra.mxu0 %v292
      %458 = vmatprep.subr.mxu0 %v300
      %459 = vmatpush1.msra.mxu0 %v299
      %460 = vmatprep.subr.mxu0 %v307
      %461 = vmatpush1.msra.mxu0 %v306
      %462 = vmatprep.subr.mxu0 %v314
      %463 = vmatpush1.msra.mxu0 %v313
      %464 = vmatprep.subr.mxu0 %v321
      %465 = vmatpush1.msra.mxu0 %v320
      %466 = vmatprep.subr.mxu0 %v328
      %467 = vmatpush1.msra.mxu0 %v327
      %468 = vmatprep.subr.mxu0 %v335
      %469 = vmatpush1.msra.mxu0 %v334
      %470 = vmatprep.subr.mxu0 %v342
      %471 = vmatpush1.msra.mxu0 %v341
      %472 = vmatprep.subr.mxu0 %v349
      %473 = vmatpush1.msra.mxu0 %v348
      %474 = vmatprep.subr.mxu0 %v356
      %475 = vmatpush1.msra.mxu0 %v355
      %476 = vmatprep.subr.mxu0 %v363
      %477 = vmatpush1.msra.mxu0 %v362
      %478 = vmatprep.subr.mxu0 %v370
      %479 = vmatpush1.msra.mxu0 %v369
      %480 = vmatprep.subr.mxu0 %v377
      %481 = vmatpush1.msra.mxu0 %v376
      %482 = vmatprep.subr.mxu0 %v384
      %483 = vmatpush1.msra.mxu0 %v383
      %484 = vmatprep.subr.mxu0 %v391
      %485 = vmatpush1.msra.mxu0 %v390
      %486 = vmatprep.subr.mxu0 %v398
      %487 = vmatpush1.msra.mxu0 %v397
      %488 = vmatprep.subr.mxu0 %v405
      %489 = vmatpush1.msra.mxu0 %v404
      %490 = vmatprep.subr.mxu0 0.0
      %491 = vmatpush1.msra.mxu0 0.0
      %492 = vmatprep.subr.mxu0 0.0
      %493 = vmatpush1.msra.mxu0 0.0
      %494 = vmatprep.subr.mxu0 0.0
      %495 = vmatpush1.msra.mxu0 0.0
      %496 = vmatprep.subr.mxu0 0.0
      %497 = vmatpush1.msra.mxu0 0.0
      %498 = vmatprep.subr.mxu0 0.0
      %499 = vmatpush1.msra.mxu0 0.0
      %500 = vmatprep.subr.mxu0 0.0
      %501 = vmatpush1.msra.mxu0 0.0
      %502 = vmatprep.subr.mxu0 0.0
      %503 = vmatpush1.msra.mxu0 0.0
      %504 = vmatprep.subr.mxu0 0.0
      %505 = vmatpush1.msra.mxu0 0.0
      %506 = vmatprep.subr.mxu0 0.0
      %507 = vmatpush1.msra.mxu0 0.0
      %508 = vmatprep.subr.mxu0 0.0
      %509 = vmatpush1.msra.mxu0 0.0
      %510 = vmatprep.subr.mxu0 0.0
      %511 = vmatpush1.msra.mxu0 0.0
      %512 = vmatprep.subr.mxu0 0.0
      %513 = vmatpush1.msra.mxu0 0.0
      %514 = vmatprep.subr.mxu0 0.0
      %515 = vmatpush1.msra.mxu0 0.0
      %516 = vmatprep.subr.mxu0 0.0
      %517 = vmatpush1.msra.mxu0 0.0
      %518 = vmatprep.mubr.f32.mxu0 %v449
      %519 = vmatmul.mubr.f32.gmra.mrb[0].mxu0 %v281
      %v520 = vpop.f32.mrb[0].mxu0
      %v521 = vadd.f32 %v416, %v520
      %v522 = vpop.f32.mrb[0].mxu0
      %v523 = vadd.f32 %v420, %v522
      %524 = vmatprep.mubr.f32.mxu0 %v452
      %525 = vmatmul.mubr.f32.gmra.mrb[0].mxu0 %v283
      %v526 = vpop.f32.mrb[0].mxu0
      %v527 = vadd.f32 %v416, %v526
      %v528 = vpop.f32.mrb[0].mxu0
      %v529 = vadd.f32 %v420, %v528
      %530 = vdwg.mxu0
      %531 = vmatprep.subr.mxu0 %v288
      %532 = vmatpush1.msra.mxu0 %v287
      %533 = vmatprep.subr.mxu0 %v295
      %534 = vmatpush1.msra.mxu0 %v294
      %535 = vmatprep.subr.mxu0 %v302
      %536 = vmatpush1.msra.mxu0 %v301
      %537 = vmatprep.subr.mxu0 %v309
      %538 = vmatpush1.msra.mxu0 %v308
      %539 = vmatprep.subr.mxu0 %v316
      %540 = vmatpush1.msra.mxu0 %v315
      %541 = vmatprep.subr.mxu0 %v323
      %542 = vmatpush1.msra.mxu0 %v322
      %543 = vmatprep.subr.mxu0 %v330
      %544 = vmatpush1.msra.mxu0 %v329
      %545 = vmatprep.subr.mxu0 %v337
      %546 = vmatpush1.msra.mxu0 %v336
      %547 = vmatprep.subr.mxu0 %v344
      %548 = vmatpush1.msra.mxu0 %v343
      %549 = vmatprep.subr.mxu0 %v351
      %550 = vmatpush1.msra.mxu0 %v350
      %551 = vmatprep.subr.mxu0 %v358
      %552 = vmatpush1.msra.mxu0 %v357
      %553 = vmatprep.subr.mxu0 %v365
      %554 = vmatpush1.msra.mxu0 %v364
      %555 = vmatprep.subr.mxu0 %v372
      %556 = vmatpush1.msra.mxu0 %v371
      %557 = vmatprep.subr.mxu0 %v379
      %558 = vmatpush1.msra.mxu0 %v378
      %559 = vmatprep.subr.mxu0 %v386
      %560 = vmatpush1.msra.mxu0 %v385
      %561 = vmatprep.subr.mxu0 %v393
      %562 = vmatpush1.msra.mxu0 %v392
      %563 = vmatprep.subr.mxu0 %v400
      %564 = vmatpush1.msra.mxu0 %v399
      %565 = vmatprep.subr.mxu0 %v407
      %566 = vmatpush1.msra.mxu0 %v406
      %567 = vmatprep.subr.mxu0 0.0
      %568 = vmatpush1.msra.mxu0 0.0
      %569 = vmatprep.subr.mxu0 0.0
      %570 = vmatpush1.msra.mxu0 0.0
      %571 = vmatprep.subr.mxu0 0.0
      %572 = vmatpush1.msra.mxu0 0.0
      %573 = vmatprep.subr.mxu0 0.0
      %574 = vmatpush1.msra.mxu0 0.0
      %575 = vmatprep.subr.mxu0 0.0
      %576 = vmatpush1.msra.mxu0 0.0
      %577 = vmatprep.subr.mxu0 0.0
      %578 = vmatpush1.msra.mxu0 0.0
      %579 = vmatprep.subr.mxu0 0.0
      %580 = vmatpush1.msra.mxu0 0.0
      %581 = vmatprep.subr.mxu0 0.0
      %582 = vmatpush1.msra.mxu0 0.0
      %583 = vmatprep.subr.mxu0 0.0
      %584 = vmatpush1.msra.mxu0 0.0
      %585 = vmatprep.subr.mxu0 0.0
      %586 = vmatpush1.msra.mxu0 0.0
      %587 = vmatprep.subr.mxu0 0.0
      %588 = vmatpush1.msra.mxu0 0.0
      %589 = vmatprep.subr.mxu0 0.0
      %590 = vmatpush1.msra.mxu0 0.0
      %591 = vmatprep.subr.mxu0 0.0
      %592 = vmatpush1.msra.mxu0 0.0
      %593 = vmatprep.subr.mxu0 0.0
      %594 = vmatpush1.msra.mxu0 0.0
      %595 = vmatprep.mubr.f32.mxu0 %v449
      %596 = vmatmul.mubr.f32.gmra.mrb[0].mxu0 %v281
      %v597 = vpop.f32.mrb[0].mxu0
      %v598 = vadd.f32 %v424, %v597
      %v599 = vpop.f32.mrb[0].mxu0
      %v600 = vadd.f32 %v428, %v599
      %601 = vmatprep.mubr.f32.mxu0 %v452
      %602 = vmatmul.mubr.f32.gmra.mrb[0].mxu0 %v283
      %v603 = vpop.f32.mrb[0].mxu0
      %v604 = vadd.f32 %v424, %v603
      %v605 = vpop.f32.mrb[0].mxu0
      %v606 = vadd.f32 %v428, %v605
      %607 = vdwg.mxu0
      %608 = vmatprep.subr.mxu0 %v290
      %609 = vmatpush1.msra.mxu0 %v289
      %610 = vmatprep.subr.mxu0 %v297
      %611 = vmatpush1.msra.mxu0 %v296
      %612 = vmatprep.subr.mxu0 %v304
      %613 = vmatpush1.msra.mxu0 %v303
      %614 = vmatprep.subr.mxu0 %v311
      %615 = vmatpush1.msra.mxu0 %v310
      %616 = vmatprep.subr.mxu0 %v318
      %617 = vmatpush1.msra.mxu0 %v317
      %618 = vmatprep.subr.mxu0 %v325
      %619 = vmatpush1.msra.mxu0 %v324
      %620 = vmatprep.subr.mxu0 %v332
      %621 = vmatpush1.msra.mxu0 %v331
      %622 = vmatprep.subr.mxu0 %v339
      %623 = vmatpush1.msra.mxu0 %v338
      %624 = vmatprep.subr.mxu0 %v346
      %625 = vmatpush1.msra.mxu0 %v345
      %626 = vmatprep.subr.mxu0 %v353
      %627 = vmatpush1.msra.mxu0 %v352
      %628 = vmatprep.subr.mxu0 %v360
      %629 = vmatpush1.msra.mxu0 %v359
      %630 = vmatprep.subr.mxu0 %v367
      %631 = vmatpush1.msra.mxu0 %v366
      %632 = vmatprep.subr.mxu0 %v374
      %633 = vmatpush1.msra.mxu0 %v373
      %634 = vmatprep.subr.mxu0 %v381
      %635 = vmatpush1.msra.mxu0 %v380
      %636 = vmatprep.subr.mxu0 %v388
      %637 = vmatpush1.msra.mxu0 %v387
      %638 = vmatprep.subr.mxu0 %v395
      %639 = vmatpush1.msra.mxu0 %v394
      %640 = vmatprep.subr.mxu0 %v402
      %641 = vmatpush1.msra.mxu0 %v401
      %642 = vmatprep.subr.mxu0 %v409
      %643 = vmatpush1.msra.mxu0 %v408
      %644 = vmatprep.subr.mxu0 0.0
      %645 = vmatpush1.msra.mxu0 0.0
      %646 = vmatprep.subr.mxu0 0.0
      %647 = vmatpush1.msra.mxu0 0.0
      %648 = vmatprep.subr.mxu0 0.0
      %649 = vmatpush1.msra.mxu0 0.0
      %650 = vmatprep.subr.mxu0 0.0
      %651 = vmatpush1.msra.mxu0 0.0
      %652 = vmatprep.subr.mxu0 0.0
      %653 = vmatpush1.msra.mxu0 0.0
      %654 = vmatprep.subr.mxu0 0.0
      %655 = vmatpush1.msra.mxu0 0.0
      %656 = vmatprep.subr.mxu0 0.0
      %657 = vmatpush1.msra.mxu0 0.0
      %658 = vmatprep.subr.mxu0 0.0
      %659 = vmatpush1.msra.mxu0 0.0
      %660 = vmatprep.subr.mxu0 0.0
      %661 = vmatpush1.msra.mxu0 0.0
      %662 = vmatprep.subr.mxu0 0.0
      %663 = vmatpush1.msra.mxu0 0.0
      %664 = vmatprep.subr.mxu0 0.0
      %665 = vmatpush1.msra.mxu0 0.0
      %666 = vmatprep.subr.mxu0 0.0
      %667 = vmatpush1.msra.mxu0 0.0
      %668 = vmatprep.subr.mxu0 0.0
      %669 = vmatpush1.msra.mxu0 0.0
      %670 = vmatprep.subr.mxu0 0.0
      %671 = vmatpush1.msra.mxu0 0.0
      %672 = vmatprep.mubr.f32.mxu0 %v449
      %673 = vmatmul.mubr.f32.gmra.mrb[0].mxu0 %v281
      %v674 = vpop.f32.mrb[0].mxu0
      %v675 = vadd.f32 %v432, %v674
      %v676 = vpop.f32.mrb[0].mxu0
      %v677 = vadd.f32 %v436, %v676
      %678 = vmatprep.mubr.f32.mxu0 %v452
      %679 = vmatmul.mubr.f32.gmra.mrb[0].mxu0 %v283
      %v680 = vpop.f32.mrb[0].mxu0
      %v681 = vadd.f32 %v432, %v680
      %v682 = vpop.f32.mrb[0].mxu0
      %v683 = vadd.f32 %v436, %v682
      %684 = vdwg.mxu0
      %685 = vmatprep.subr.mxu0 0.0
      %686 = vmatpush1.msra.mxu0 %v291
      %687 = vmatprep.subr.mxu0 0.0
      %688 = vmatpush1.msra.mxu0 %v298
      %689 = vmatprep.subr.mxu0 0.0
      %690 = vmatpush1.msra.mxu0 %v305
      %691 = vmatprep.subr.mxu0 0.0
      %692 = vmatpush1.msra.mxu0 %v312
      %693 = vmatprep.subr.mxu0 0.0
      %694 = vmatpush1.msra.mxu0 %v319
      %695 = vmatprep.subr.mxu0 0.0
      %696 = vmatpush1.msra.mxu0 %v326
      %697 = vmatprep.subr.mxu0 0.0
      %698 = vmatpush1.msra.mxu0 %v333
      %699 = vmatprep.subr.mxu0 0.0
      %700 = vmatpush1.msra.mxu0 %v340
      %701 = vmatprep.subr.mxu0 0.0
      %702 = vmatpush1.msra.mxu0 %v347
      %703 = vmatprep.subr.mxu0 0.0
      %704 = vmatpush1.msra.mxu0 %v354
      %705 = vmatprep.subr.mxu0 0.0
      %706 = vmatpush1.msra.mxu0 %v361
      %707 = vmatprep.subr.mxu0 0.0
      %708 = vmatpush1.msra.mxu0 %v368
      %709 = vmatprep.subr.mxu0 0.0
      %710 = vmatpush1.msra.mxu0 %v375
      %711 = vmatprep.subr.mxu0 0.0
      %712 = vmatpush1.msra.mxu0 %v382
      %713 = vmatprep.subr.mxu0 0.0
      %714 = vmatpush1.msra.mxu0 %v389
      %715 = vmatprep.subr.mxu0 0.0
      %716 = vmatpush1.msra.mxu0 %v396
      %717 = vmatprep.subr.mxu0 0.0
      %718 = vmatpush1.msra.mxu0 %v403
      %719 = vmatprep.subr.mxu0 0.0
      %720 = vmatpush1.msra.mxu0 %v410
      %721 = vmatprep.subr.mxu0 0.0
      %722 = vmatpush1.msra.mxu0 0.0
      %723 = vmatprep.subr.mxu0 0.0
      %724 = vmatpush1.msra.mxu0 0.0
      %725 = vmatprep.subr.mxu0 0.0
      %726 = vmatpush1.msra.mxu0 0.0
      %727 = vmatprep.subr.mxu0 0.0
      %728 = vmatpush1.msra.mxu0 0.0
      %729 = vmatprep.subr.mxu0 0.0
      %730 = vmatpush1.msra.mxu0 0.0
      %731 = vmatprep.subr.mxu0 0.0
      %732 = vmatpush1.msra.mxu0 0.0
      %733 = vmatprep.subr.mxu0 0.0
      %734 = vmatpush1.msra.mxu0 0.0
      %735 = vmatprep.subr.mxu0 0.0
      %736 = vmatpush1.msra.mxu0 0.0
      %737 = vmatprep.subr.mxu0 0.0
      %738 = vmatpush1.msra.mxu0 0.0
      %739 = vmatprep.subr.mxu0 0.0
      %740 = vmatpush1.msra.mxu0 0.0
      %741 = vmatprep.subr.mxu0 0.0
      %742 = vmatpush1.msra.mxu0 0.0
      %743 = vmatprep.subr.mxu0 0.0
      %744 = vmatpush1.msra.mxu0 0.0
      %745 = vmatprep.subr.mxu0 0.0
      %746 = vmatpush1.msra.mxu0 0.0
      %747 = vmatprep.subr.mxu0 0.0
      %748 = vmatpush1.msra.mxu0 0.0
      %749 = vmatprep.mubr.f32.mxu0 %v449
      %750 = vmatmul.mubr.f32.gmra.mrb[0].mxu0 %v281
      %v751 = vpop.f32.mrb[0].mxu0
      %v752 = vadd.f32 %v440, %v751
      %v753 = vpop.f32.mrb[0].mxu0
      %754 = vmatprep.mubr.f32.mxu0 %v452
      %755 = vmatmul.mubr.f32.gmra.mrb[0].mxu0 %v283
      %v756 = vpop.f32.mrb[0].mxu0
      %v757 = vadd.f32 %v440, %v756
      %v758 = vpop.f32.mrb[0].mxu0
      %759 = vdwg.mxu0
      %760 = vst [vmem:[%s170] sm:$0xff] %v521
      %761 = vst [vmem:[%s170 + $0x8] sm:$0xff] %v523
      %762 = vst [vmem:[%s170 + $0x10] sm:$0xff] %v598
      %763 = vst [vmem:[%s170 + $0x18] sm:$0xff] %v600
      %764 = vst [vmem:[%s170 + $0x20] sm:$0xff] %v675
      %765 = vst [vmem:[%s170 + $0x28] sm:$0xff] %v677
      %766 = vst [vmem:[%s170 + $0x30] sm:$0xff] %v752
      %767 = vst [vmem:[%s170 + $0x38] sm:$0x3f] %v527
      %768 = vst [vmem:[%s170 + $0x40] sm:$0x3f] %v529
      %769 = vst [vmem:[%s170 + $0x48] sm:$0x3f] %v604
      %770 = vst [vmem:[%s170 + $0x50] sm:$0x3f] %v606
      %771 = vst [vmem:[%s170 + $0x58] sm:$0x3f] %v681
      %772 = vst [vmem:[%s170 + $0x60] sm:$0x3f] %v683
      %773 = vst [vmem:[%s170 + $0x68] sm:$0x3f] %v757
      %p774 = scmp.lt.s32.totalorder %s14, 1
      %s775 = scalar_select %p774, %s14, 1
      %s776 = smul.addr %s775, 14
      %s777 = smul.addr %s776, 8
      %s778 = scalar_lea.vmem %s3, %s777
      // Predicated region
      $region33: #{conv2d_pallas.1} parent=31 // pred_check
        %p779 = pneg %p100
      $region34: #{conv2d_pallas.1} parent=31 // pred_check_branch
        %781 = sbr.rel (%p779) target = $region36
      $region35: #{conv2d_pallas.1} parent=31 // pred_region
        _
      $region36: #{conv2d_pallas.1} parent=31 // pred_fallthru
        _
    $region32: #{conv2d_pallas.1} parent=5 // pred_fallthru
      _
    %p782 = scmp.le.s32.totalorder 2, %s9
    // Predicated region
    $region37: #{conv2d_pallas.1} parent=5 // pred_check
      %p783 = pneg %p782
    $region38: #{conv2d_pallas.1} parent=5 // pred_check_branch
      %785 = sbr.rel (%p783) target = $region40
    $region39: #{conv2d_pallas.1} parent=5 // pred_region
      %s786 = ssub.s32 %s9, 2
      // Predicated region
      $region41: #{conv2d_pallas.1} parent=39 // pred_check
        %p787 = pneg %p106
      $region42: #{conv2d_pallas.1} parent=39 // pred_check_branch
        %789 = sbr.rel (%p787) target = $region44
      $region43: #{conv2d_pallas.1} parent=39 // pred_region
        %p790 = scmp.lt.s32.totalorder %s15, 1
        %s791 = scalar_select %p790, %s15, 1
        %s792 = smul.addr %s791, 14
        %s793 = smul.addr %s792, 8
        %s794 = scalar_lea.vmem %s3, %s793
      $region44: #{conv2d_pallas.1} parent=39 // pred_fallthru
        _
    $region40: #{conv2d_pallas.1} parent=5 // pred_fallthru
      _
  $region6: #{conv2d_pallas.1} parent=0 // loop_footer
    %s13 = sadd.s32 1, %s9
  $region7: #{conv2d_pallas.1} parent=0 // loop_footer_branch
    %8 = sbr.rel target = $region3
  $region8: #{conv2d_pallas.1} parent=0 // loop_exit
    _

</llo_original>
